<compile_context>
chip_gen: v7x
topology: tpu7x:2x2x1
jax: 0.10.0
libtpu: 0.0.40
codegen_flags: <defaults>
</compile_context>

<pallas_src>
import jax
import jax.numpy as jnp
from jax.experimental import pallas as pl
from jax.experimental.pallas import tpu as pltpu


def mil_regression_kernel(x_ref, w_igo_ref, b_igo_ref, w_eff_ref, b_eff_ref,
                          out_ref):
    hdim = w_eff_ref.shape[1]
    x = x_ref[...]                                               # [S, F]
    # Single LSTM step with h0 = c0 = 0:
    #   gates = x @ W_ih^T + (b_ih + b_hh)   (the h0 @ W_hh^T term vanishes,
    #   and the forget gate multiplies c0 == 0 so its columns were dropped).
    # Gate layout is (i | g | o); with H=64 the o slice starts at lane 128.
    gates = jnp.dot(x, w_igo_ref[...],
                    preferred_element_type=jnp.float32) + b_igo_ref[...]
    i_g = jax.nn.sigmoid(gates[:, 0 * hdim:1 * hdim])
    g_g = jnp.tanh(gates[:, 1 * hdim:2 * hdim])
    o_g = jax.nn.sigmoid(gates[:, 2 * hdim:3 * hdim])
    h = o_g * jnp.tanh(i_g * g_g)                                # [S, H]
    # Dense head folded offline into one affine map; N=1 matmul would waste
    # the MXU, so use VPU multiply + lane reduction (XLU) instead.
    y = jnp.sum(h * w_eff_ref[...], axis=-1, keepdims=True) + b_eff_ref[...]
    out_ref[...] = y                                             # [S, 1]


def init_params(key, feature_num=18, hidden_dim=64):
    """Deterministic synthetic parameters (PyTorch-style uniform init bounds).

    Weight matrices are stored as [in, out] (already transposed relative to
    torch's nn.Linear / nn.LSTM storage). Returns the FULL parameter set
    (equivalent to the torch module); `fold_params` turns it into the compact
    operands the kernel consumes.
    """
    ks = jax.random.split(key, 11)

    def unif(k, shape, fan_in):
        bound = 1.0 / float(fan_in) ** 0.5
        return jax.random.uniform(k, shape, jnp.float32, -bound, bound)

    w_ih = unif(ks[0], (feature_num, 4 * hidden_dim), hidden_dim)   # [F, 4H]
    b_ih = unif(ks[1], (1, 4 * hidden_dim), hidden_dim)
    b_hh = unif(ks[2], (1, 4 * hidden_dim), hidden_dim)

    dims = [hidden_dim, 1028, 512, 128, 1]
    dense = []
    for li in range(4):
        d_in, d_out = dims[li], dims[li + 1]
        w = unif(ks[3 + 2 * li], (d_in, d_out), d_in)               # [in, out]
        b = unif(ks[4 + 2 * li], (1, d_out), d_in)
        dense.extend([w, b])

    return (w_ih, b_ih, b_hh, *dense)


def fold_params(params, hidden_dim=64):
    """Offline algebraic folding: drop dead forget gate, fold the dense head."""
    w_ih, b_ih, b_hh, w1, b1, w2, b2, w3, b3, w4, b4 = params
    H = hidden_dim
    b_gate = b_ih + b_hh                                            # [1, 4H]
    # Torch LSTM gate order is (i, f, g, o); f multiplies c0 == 0 so drop it
    # and reorder to (i | g | o).
    w_igo = jnp.concatenate(
        [w_ih[:, 0:H], w_ih[:, 2 * H:3 * H], w_ih[:, 3 * H:4 * H]], axis=1)
    b_igo = jnp.concatenate(
        [b_gate[:, 0:H], b_gate[:, 2 * H:3 * H], b_gate[:, 3 * H:4 * H]], axis=1)
    # Fold the activation-free 4-layer head into one affine map [H] -> [1].
    w_eff = w1 @ w2 @ w3 @ w4                                       # [H, 1]
    b_eff = ((b1 @ w2 + b2) @ w3 + b3) @ w4 + b4                    # [1, 1]
    return (w_igo, b_igo, w_eff.T, b_eff)                           # w_eff as [1, H]


def mil_regression_forward(inputs, kernel_params):
    """inputs: [1, seg_num, feature_num] -> outputs: [seg_num] float32."""
    assert inputs.shape[0] == 1, "MIL loop in the torch module implies batch=1"
    x = inputs[0].astype(jnp.float32)                # [S, F]
    seg_num = x.shape[0]
    args = (x,) + tuple(kernel_params)
    vmem = pl.BlockSpec(memory_space=pltpu.MemorySpace.VMEM)
    out = pl.pallas_call(
        mil_regression_kernel,
        out_shape=jax.ShapeDtypeStruct((seg_num, 1), jnp.float32),
        in_specs=[vmem] * len(args),
        out_specs=vmem,
    )(*args)
    return out[:, 0]                                 # [seg_num]


def _reference_forward(inputs, params):
    """Pure-JAX reference with the UNFOLDED layer-by-layer math."""
    w_ih, b_ih, b_hh, w1, b1, w2, b2, w3, b3, w4, b4 = params
    x = inputs[0]
    gates = x @ w_ih + (b_ih + b_hh)
    H = w1.shape[0]
    i_g = jax.nn.sigmoid(gates[:, :H])
    g_g = jnp.tanh(gates[:, 2 * H:3 * H])
    o_g = jax.nn.sigmoid(gates[:, 3 * H:])
    h = o_g * jnp.tanh(i_g * g_g)
    y = h @ w1 + b1
    y = y @ w2 + b2
    y = y @ w3 + b3
    y = y @ w4 + b4
    return y[:, 0]


if __name__ == "__main__":
    feature_num, hidden_dim, seg_num = 18, 64, 10
    key = jax.random.PRNGKey(0)
    pkey, xkey = jax.random.split(key)
    params = init_params(pkey, feature_num, hidden_dim)
    kernel_params = fold_params(params, hidden_dim)
    inputs = jax.random.normal(xkey, (1, seg_num, feature_num), jnp.float32)

    out = mil_regression_forward(inputs, kernel_params)
    out = jax.block_until_ready(out)
    assert out.shape == (seg_num,), out.shape

    ref = _reference_forward(inputs, params)
    assert jnp.allclose(out, ref, atol=1e-4, rtol=1e-4), (out, ref)

    print("KERNEL_OK")
</pallas_src>

<mosaic_0001>
module attributes {stable_mosaic.version = 11 : i64} {
  func.func @mil_regression_kernel(%arg0: memref<10x18xf32, #tpu.memory_space<vmem>>, %arg1: memref<18x192xf32, #tpu.memory_space<vmem>>, %arg2: memref<1x192xf32, #tpu.memory_space<vmem>>, %arg3: memref<1x64xf32, #tpu.memory_space<vmem>>, %arg4: memref<1x1xf32, #tpu.memory_space<vmem>>, %arg5: memref<10x1xf32, #tpu.memory_space<vmem>>) attributes {dimension_semantics = [], scalar_prefetch = 0 : i64, scratch_operands = 0 : i64, tpu.core_type = #tpu.core_type<tc>} {
    %c0 = arith.constant 0 : index
    %c0_0 = arith.constant 0 : index
    %0 = vector.load %arg0[%c0, %c0_0] : memref<10x18xf32, #tpu.memory_space<vmem>>, vector<10x18xf32>
    %c0_1 = arith.constant 0 : index
    %c0_2 = arith.constant 0 : index
    %1 = vector.load %arg1[%c0_1, %c0_2] : memref<18x192xf32, #tpu.memory_space<vmem>>, vector<18x192xf32>
    %cst = arith.constant dense<0.000000e+00> : vector<10x192xf32>
    %2 = tpu.matmul %0, %1, %cst {dimension_numbers = #tpu.dot_dimension_numbers<[1], [0], [0], [1], [0, 0, 1, 1], [], []>} : vector<10x18xf32>, vector<18x192xf32>, vector<10x192xf32> -> vector<10x192xf32>
    %c0_3 = arith.constant 0 : index
    %c0_4 = arith.constant 0 : index
    %3 = vector.load %arg2[%c0_3, %c0_4] : memref<1x192xf32, #tpu.memory_space<vmem>>, vector<1x192xf32>
    %4 = vector.broadcast %3 : vector<1x192xf32> to vector<10x192xf32>
    %5 = arith.addf %2, %4 : vector<10x192xf32>
    %6 = vector.extract_strided_slice %5 {offsets = [0, 0], sizes = [10, 64], strides = [1, 1]} : vector<10x192xf32> to vector<10x64xf32>
    %7 = arith.negf %6 : vector<10x64xf32>
    %8 = math.exp %7 : vector<10x64xf32>
    %cst_5 = arith.constant 1.000000e+00 : f32
    %9 = vector.broadcast %cst_5 : f32 to vector<10x64xf32>
    %10 = arith.addf %9, %8 : vector<10x64xf32>
    %11 = arith.divf %9, %10 : vector<10x64xf32>
    %12 = vector.extract_strided_slice %5 {offsets = [0, 64], sizes = [10, 64], strides = [1, 1]} : vector<10x192xf32> to vector<10x64xf32>
    %13 = math.tanh %12 : vector<10x64xf32>
    %14 = vector.extract_strided_slice %5 {offsets = [0, 128], sizes = [10, 64], strides = [1, 1]} : vector<10x192xf32> to vector<10x64xf32>
    %15 = arith.negf %14 : vector<10x64xf32>
    %16 = math.exp %15 : vector<10x64xf32>
    %cst_6 = arith.constant 1.000000e+00 : f32
    %17 = vector.broadcast %cst_6 : f32 to vector<10x64xf32>
    %18 = arith.addf %17, %16 : vector<10x64xf32>
    %19 = arith.divf %17, %18 : vector<10x64xf32>
    %20 = arith.mulf %11, %13 : vector<10x64xf32>
    %21 = math.tanh %20 : vector<10x64xf32>
    %22 = arith.mulf %19, %21 : vector<10x64xf32>
    %c0_7 = arith.constant 0 : index
    %c0_8 = arith.constant 0 : index
    %23 = vector.load %arg3[%c0_7, %c0_8] : memref<1x64xf32, #tpu.memory_space<vmem>>, vector<1x64xf32>
    %24 = vector.broadcast %23 : vector<1x64xf32> to vector<10x64xf32>
    %25 = arith.mulf %22, %24 : vector<10x64xf32>
    %cst_9 = arith.constant dense<0.000000e+00> : vector<10xf32>
    %26 = vector.multi_reduction <add>, %25, %cst_9 [1] : vector<10x64xf32> to vector<10xf32>
    %27 = vector.shape_cast %26 : vector<10xf32> to vector<10x1xf32>
    %c0_10 = arith.constant 0 : index
    %c0_11 = arith.constant 0 : index
    %28 = vector.load %arg4[%c0_10, %c0_11] : memref<1x1xf32, #tpu.memory_space<vmem>>, vector<1x1xf32>
    %29 = vector.broadcast %28 : vector<1x1xf32> to vector<10x1xf32>
    %30 = arith.addf %27, %29 : vector<10x1xf32>
    %c0_12 = arith.constant 0 : index
    %c0_13 = arith.constant 0 : index
    %31 = vector.load %arg5[%c0_12, %c0_13] : memref<10x1xf32, #tpu.memory_space<vmem>>, vector<10x1xf32>
    tpu.vector_store %arg5[%c0_12, %c0_13], %30 {strides = array<i32>} : memref<10x1xf32, #tpu.memory_space<vmem>>, vector<10x1xf32>,
    return
  }
}

</mosaic_0001>

<llo_original>
// kernel: tpu_custom_call.1
$region0: #{tpu_custom_call.1}
  #allocation0 [shape = 'u32[]', space=smem, size = 0x4, offset = 0x4, fixed_abs, tag = 'smem constant byte address 0x4 - core index']
  #allocation1 [shape = 'u32[144,128]{1,0:T(1,128)}', space=vmem, size = 0x12000, scoped, tag = 'internal scratch']
  #allocation2 [shape = 'f32[1,1]{1,0:T(1,128)S(1)}', space=vmem, size = 0x200, scoped, tag = 'scoped memory for tpu_custom_call.1']
  %s0 = inlined_call_operand.hbm [shape: f32[10,18], index: 0, kind: input, shape index: {}]
  %s1 = inlined_call_operand.hbm [shape: f32[18,192], index: 1, kind: input, shape index: {}]
  %s2 = inlined_call_operand.vmem [shape: f32[1,192], index: 2, kind: input, shape index: {}]
  %s3 = inlined_call_operand.vmem [shape: f32[1,64], index: 3, kind: input, shape index: {}]
  %s4 = inlined_call_operand.<no memory space> [shape: f32[1,1], index: 4, kind: input, shape index: {}]
  %s5 = inlined_call_operand.vmem [shape: f32[10,1], index: 5, kind: output, shape index: {}]
  %s6 = sld [smem:[#allocation0]]
  $region38: #{tpu_custom_call.1} parent=0
    _
  %s8 = ssub.s32 1, %s6
  %s9 = scalar_select 0, %s8, %s6
  %v10 = vstv %s4
  %11 = vst [vmem:[#allocation2] sm:$0x1] %v10
  $region1: #{tpu_custom_call.1} parent=0
    #allocation3 [shape = 'u8[8192]{0}', space=vmem, size = 0x2000, scoped, tag = 'input window, operand 0, single buffered']
    #allocation4 [shape = 's32[1]{0}', space=sflag, size = 0x4, scoped, tag = 'scoped memory for tpu_custom_call.1']
    #allocation5 [shape = 'u8[24576]{0}', space=vmem, size = 0x6000, scoped, tag = 'input window, operand 1, single buffered']
    #allocation6 [shape = 's32[1]{0}', space=sflag, size = 0x4, scoped, tag = 'scoped memory for tpu_custom_call.1']
    %12 = vsyncpa [#allocation4], 0
    %13 = vsyncpa [#allocation6], 0
    // Predicated region
    $region2: #{tpu_custom_call.1} parent=1 // pred_check
      _
    $region3: #{tpu_custom_call.1} parent=1 // pred_check_branch
      %15 = sbr.rel (0) target = $region5
    $region4: #{tpu_custom_call.1} parent=1 // pred_region
      %s17 = ssub.s32 256, 256
      %18 = vsyncadd [#allocation4], %s17
      %s19 = sshll.u32 [#allocation3], 4
      %s20 = int_to_ptr.vmem [resolvable:$true] %s19
      %25 = dma.hbm_to_vmem [thread:$0]  %s0, 256, %s20, [#allocation4], 128, 128, 8
    $region5: #{tpu_custom_call.1} parent=1 // pred_fallthru
      _
    // Predicated region
    $region6: #{tpu_custom_call.1} parent=1 // pred_check
      _
    $region7: #{tpu_custom_call.1} parent=1 // pred_check_branch
      %27 = sbr.rel (0) target = $region9
    $region8: #{tpu_custom_call.1} parent=1 // pred_region
      %s29 = ssub.s32 768, 768
      %30 = vsyncadd [#allocation6], %s29
      %s31 = sshll.u32 [#allocation5], 4
      %s32 = int_to_ptr.vmem [resolvable:$true] %s31
      %37 = dma.hbm_to_vmem [thread:$0]  %s1, 768, %s32, [#allocation6], 256, 256, 16
    $region9: #{tpu_custom_call.1} parent=1 // pred_fallthru
      _
    // Predicated region
    $region10: #{tpu_custom_call.1} parent=1 // pred_check
      _
    $region11: #{tpu_custom_call.1} parent=1 // pred_check_branch
      %39 = sbr.rel (0) target = $region13
    $region12: #{tpu_custom_call.1} parent=1 // pred_region
      _
    $region13: #{tpu_custom_call.1} parent=1 // pred_fallthru
      _
    // Predicated region
    $region14: #{tpu_custom_call.1} parent=1 // pred_check
      _
    $region15: #{tpu_custom_call.1} parent=1 // pred_check_branch
      %41 = sbr.rel (0) target = $region17
    $region16: #{tpu_custom_call.1} parent=1 // pred_region
      _
    $region17: #{tpu_custom_call.1} parent=1 // pred_fallthru
      _
    // Predicated region
    $region18: #{tpu_custom_call.1} parent=1 // pred_check
      _
    $region19: #{tpu_custom_call.1} parent=1 // pred_check_branch
      %43 = sbr.rel (0) target = $region21
    $region20: #{tpu_custom_call.1} parent=1 // pred_region
      _
    $region21: #{tpu_custom_call.1} parent=1 // pred_fallthru
      _
    // Predicated region
    $region22: #{tpu_custom_call.1} parent=1 // pred_check
      _
    $region23: #{tpu_custom_call.1} parent=1 // pred_check_branch
      %45 = sbr.rel (0) target = $region25
    $region24: #{tpu_custom_call.1} parent=1 // pred_region
      %46 = dma.done [#allocation4], 256
    $region25: #{tpu_custom_call.1} parent=1 // pred_fallthru
      _
    // Predicated region
    $region26: #{tpu_custom_call.1} parent=1 // pred_check
      _
    $region27: #{tpu_custom_call.1} parent=1 // pred_check_branch
      %48 = sbr.rel (0) target = $region29
    $region28: #{tpu_custom_call.1} parent=1 // pred_region
      %49 = dma.done [#allocation6], 768
    $region29: #{tpu_custom_call.1} parent=1 // pred_fallthru
      _
    %v50 = vld [vmem:[#allocation3] sm:$0xff]
    %v51 = vld [vmem:[#allocation3 + $0x8] sm:$0x3]
    %v52 = vld [vmem:[#allocation5] sm:$0xff]
    %v53 = vld [vmem:[#allocation5 + $0x8] sm:$0xff]
    %v54 = vld [vmem:[#allocation5 + $0x10] sm:$0xff]
    %v55 = vld [vmem:[#allocation5 + $0x18] sm:$0xff]
    %v56 = vld [vmem:[#allocation5 + $0x20] sm:$0x3]
    %v57 = vld [vmem:[#allocation5 + $0x28] sm:$0x3]
    %v58 = vld [vmem:[%s2] sm:$0x3]
    %v60 = vlaneseq
    %v61 = vshrl.u32 %v60, 7
    %v62 = vsub.s32 0, %v61
    %v63 = vrot.slane %v58, %v62
    %v64 = vlaneseq
    %v65 = vshrl.u32 %v64, 7
    %v66 = vsub.s32 1, %v65
    %v67 = vrot.slane %v58, %v66
    %vm70 = vcmask 146432
    %v72 = vsel %vm70, %v50, 0
    %v75 = vsel %vm70, %v51, 0
    %vm77 = vcmask 1041408
    %v79 = vsel %vm77, %v56, 0
    %v82 = vsel %vm77, %v57, 0
    %84 = vmatprep.subr.mxu0 %v53
    %85 = vmatpush1.msra.mxu0 %v52
    %86 = vmatprep.subr.mxu0 %v55
    %87 = vmatpush1.msra.mxu0 %v54
    %88 = vmatprep.subr.mxu0 %v82
    %89 = vmatpush1.msra.mxu0 %v79
    %90 = vmatprep.subr.mxu0 0.0
    %91 = vmatpush1.msra.mxu0 0.0
    %92 = vmatprep.subr.mxu0 0.0
    %93 = vmatpush1.msra.mxu0 0.0
    %94 = vmatprep.subr.mxu0 0.0
    %95 = vmatpush1.msra.mxu0 0.0
    %96 = vmatprep.subr.mxu0 0.0
    %97 = vmatpush1.msra.mxu0 0.0
    %98 = vmatprep.subr.mxu0 0.0
    %99 = vmatpush1.msra.mxu0 0.0
    %100 = vmatprep.subr.mxu0 0.0
    %101 = vmatpush1.msra.mxu0 0.0
    %102 = vmatprep.subr.mxu0 0.0
    %103 = vmatpush1.msra.mxu0 0.0
    %104 = vmatprep.subr.mxu0 0.0
    %105 = vmatpush1.msra.mxu0 0.0
    %106 = vmatprep.subr.mxu0 0.0
    %107 = vmatpush1.msra.mxu0 0.0
    %108 = vmatprep.subr.mxu0 0.0
    %109 = vmatpush1.msra.mxu0 0.0
    %110 = vmatprep.subr.mxu0 0.0
    %111 = vmatpush1.msra.mxu0 0.0
    %112 = vmatprep.subr.mxu0 0.0
    %113 = vmatpush1.msra.mxu0 0.0
    %114 = vmatprep.subr.mxu0 0.0
    %115 = vmatpush1.msra.mxu0 0.0
    %116 = vmatprep.subr.mxu0 0.0
    %117 = vmatpush1.msra.mxu0 0.0
    %118 = vmatprep.subr.mxu0 0.0
    %119 = vmatpush1.msra.mxu0 0.0
    %120 = vmatprep.subr.mxu0 0.0
    %121 = vmatpush1.msra.mxu0 0.0
    %122 = vmatprep.subr.mxu0 0.0
    %123 = vmatpush1.msra.mxu0 0.0
    %124 = vmatprep.subr.mxu0 0.0
    %125 = vmatpush1.msra.mxu0 0.0
    %126 = vmatprep.subr.mxu0 0.0
    %127 = vmatpush1.msra.mxu0 0.0
    %128 = vmatprep.subr.mxu0 0.0
    %129 = vmatpush1.msra.mxu0 0.0
    %130 = vmatprep.subr.mxu0 0.0
    %131 = vmatpush1.msra.mxu0 0.0
    %132 = vmatprep.subr.mxu0 0.0
    %133 = vmatpush1.msra.mxu0 0.0
    %134 = vmatprep.subr.mxu0 0.0
    %135 = vmatpush1.msra.mxu0 0.0
    %136 = vmatprep.subr.mxu0 0.0
    %137 = vmatpush1.msra.mxu0 0.0
    %138 = vmatprep.subr.mxu0 0.0
    %139 = vmatpush1.msra.mxu0 0.0
    %140 = vmatprep.subr.mxu0 0.0
    %141 = vmatpush1.msra.mxu0 0.0
    %142 = vmatprep.subr.mxu0 0.0
    %143 = vmatpush1.msra.mxu0 0.0
    %144 = vmatprep.subr.mxu0 0.0
    %145 = vmatpush1.msra.mxu0 0.0
    %146 = vmatprep.subr.mxu0 0.0
    %147 = vmatpush1.msra.mxu0 0.0
    %148 = vmatprep.mubr.f32.mxu0 0.0
    %149 = vmatmul.mubr.f32.gmra.mrb[0].mxu0 %v72
    %v150 = vpop.f32.mrb[0].mxu0
    %v151 = vadd.f32 %v63, %v150
    %v152 = vpop.f32.mrb[0].mxu0
    %v153 = vadd.f32 %v67, %v152
    %154 = vmatprep.mubr.f32.mxu0 0.0
    %155 = vmatmul.mubr.f32.gmra.mrb[0].mxu0 %v75
    %v156 = vpop.f32.mrb[0].mxu0
    %v157 = vadd.f32 %v63, %v156
    %v158 = vpop.f32.mrb[0].mxu0
    %v159 = vadd.f32 %v67, %v158
    %160 = vdwg.mxu0
    %v161 = vxor.u32 %v151, 2147483648
    %v162 = vxor.u32 %v157, 2147483648
    %v163 = vmul.f32 %v161, 1.442695
    %v164 = vpow.pop %v163
    %v165 = vmul.f32 %v162, 1.442695
    %v166 = vpow.pop %v165
    %v167 = vadd.f32 %v164, 1.0
    %v168 = vadd.f32 %v166, 1.0
    %v169 = vrcp.pop %v167
    %v170 = vmul.f32 1.0, %v169
    %v171 = vrcp.pop %v168
    %v172 = vmul.f32 1.0, %v171
    %v173 = vtanh.pop %v151
    %v174 = vtanh.pop %v157
    %v175 = vxor.u32 %v153, 2147483648
    %v176 = vxor.u32 %v159, 2147483648
    %v177 = vmul.f32 %v175, 1.442695
    %v178 = vpow.pop %v177
    %v179 = vmul.f32 %v176, 1.442695
    %v180 = vpow.pop %v179
    %v181 = vadd.f32 %v178, 1.0
    %v182 = vadd.f32 %v180, 1.0
    %v183 = vrcp.pop %v181
    %v184 = vmul.f32 1.0, %v183
    %v185 = vrcp.pop %v182
    %v186 = vmul.f32 1.0, %v185
    %189 = vrot.lane.b32.xlu0 %v173, 64
    %v190 = vpop.permute.xlu0 %189
    %191 = vrot.lane.b32.xlu0 %v174, 64
    %v192 = vpop.permute.xlu0 %191
    %v195 = vmul.f32 %v170, %v190
    %v196 = vmul.f32 %v172, %v192
    %v197 = vtanh.pop %v195
    %v198 = vtanh.pop %v196
    %v199 = vmul.f32 %v184, %v197
    %v200 = vmul.f32 %v186, %v198
    %v201 = vld [vmem:[%s3] sm:$0x1]
    %v203 = vlaneseq
    %v204 = vshrl.u32 %v203, 7
    %v205 = vsub.s32 0, %v204
    %v206 = vrot.slane %v201, %v205
    %v208 = vmul.f32 %v199, %v206
    %v209 = vmul.f32 %v200, %v206
    %vm210 = vcmask 523264
    %v211 = vsel %vm210, %v208, 0.0
    %212 = vadd.xlane.f32.xlu0 %v211
    %v213 = vpop.xlane.xlu0 %212
    %vm214 = vcmask 517120
    %v215 = vsel %vm214, %v209, 0.0
    %216 = vadd.xlane.f32.xlu0 %v215
    %v217 = vpop.xlane.xlu0 %216
    %v218 = vld [vmem:[#allocation2] sm:$0x1]
    %v220 = vlaneseq
    %v221 = vshrl.u32 %v220, 7
    %v222 = vsub.s32 0, %v221
    %v223 = vrot.slane %v218, %v222
    %v225 = vadd.f32 %v213, %v223
    %v226 = vadd.f32 %v217, %v223
    %vm227 = vcmask 7168
    %228 = vst.msk [vmem:[%s5] sm:$0xff] %vm227, %v225
    %vm229 = vcmask 1024
    %230 = vst.msk [vmem:[%s5 + $0x8] sm:$0x3] %vm229, %v226
    // Predicated region
    $region30: #{tpu_custom_call.1} parent=1 // pred_check
      _
    $region31: #{tpu_custom_call.1} parent=1 // pred_check_branch
      %232 = sbr.rel (0) target = $region33
    $region32: #{tpu_custom_call.1} parent=1 // pred_region
      _
    $region33: #{tpu_custom_call.1} parent=1 // pred_fallthru
      _
    // Predicated region
    $region34: #{tpu_custom_call.1} parent=1 // pred_check
      _
    $region35: #{tpu_custom_call.1} parent=1 // pred_check_branch
      %234 = sbr.rel (0) target = $region37
    $region36: #{tpu_custom_call.1} parent=1 // pred_region
      _
    $region37: #{tpu_custom_call.1} parent=1 // pred_fallthru
      _
    %235 = vsyncpa [#allocation4], 1
    %236 = vsyncpa [#allocation6], 1

</llo_original>
